<compile_context>
chip_gen: v7x
topology: tpu7x:2x2x1
jax: 0.10.0
libtpu: 0.0.40
codegen_flags: <defaults>
</compile_context>

<pallas_src>
import math

import jax
import jax.numpy as jnp
from jax.experimental import pallas as pl
from jax.experimental.pallas import tpu as pltpu

_MiB = 1024 * 1024


def _attention_kernel(x_ref, w_ref, b_ref, o_ref):
    # x_ref: (Bt, S, F)   block of batch rows (native dtype, no block upcast)
    # w_ref: (1, F)       attention projection weight (lane-dense)
    # b_ref: (1, S)       per-step bias (lane-dense)
    # o_ref: (Bt, F)      output rows for this block
    x = x_ref[...]                                    # (Bt, S, F) native dtype
    w = w_ref[...].astype(x.dtype)                    # (1, F)
    b = b_ref[...].astype(jnp.float32)                # (1, S)

    # Logits: VPU multiply in the input dtype, f32-accumulated lane reduction.
    eij = jnp.sum(x * w, axis=-1, dtype=jnp.float32) + b     # (Bt, S)
    eij = jnp.tanh(eij)
    a = jnp.exp(eij)                                          # (Bt, S)
    denom = jnp.sum(a, axis=-1, keepdims=True)                # (Bt, 1)
    # Exact reciprocal (approx=True would risk the 1e-5 tolerance); then the
    # normalized weights get +1e-10 to match the PyTorch order of operations.
    a = a * pl.reciprocal(denom, approx=False) + 1e-10        # (Bt, S)

    # Weighted sum over the step (sublane) axis, f32 accumulation.
    aw = a.astype(x.dtype)[:, :, None]                        # (Bt, S, 1)
    out = jnp.sum(x * aw, axis=1, dtype=jnp.float32)          # (Bt, F)
    o_ref[...] = out.astype(o_ref.dtype)


def _tpu_vmem_capacity_bytes():
    """Physical VMEM per core; conservative (v7x-sized) fallback on failure."""
    try:
        return int(pltpu.get_tpu_info().vmem_capacity_bytes)
    except Exception:
        return 64 * _MiB


def attention_forward(x, weight, bias, *, block_b=None):
    """x: (B, S, F), weight: (F, 1), bias: (S,) -> (B, F)."""
    B, S, F = x.shape
    itemsize = jnp.dtype(x.dtype).itemsize
    bytes_per_row = S * F * itemsize

    vmem_cap = _tpu_vmem_capacity_bytes()
    if vmem_cap <= 64 * _MiB:
        # v7x: 64 MiB VMEM per TensorCore -> smaller buffers, tighter limit.
        buf_budget = 4 * _MiB
        vmem_limit = 48 * _MiB
    else:
        # v5e / v6e: 128 MiB physical VMEM -> big HBM-roofline-friendly blocks.
        buf_budget = 8 * _MiB
        vmem_limit = 64 * _MiB

    b_padded8 = ((B + 7) // 8) * 8

    if block_b is None:
        # Bytes-budget-only sizing: multiple of 8 rows, no hard row cap.
        block_b = max(8, ((buf_budget // max(bytes_per_row, 1)) // 8) * 8)
    block_b = max(8, (block_b // 8) * 8)
    block_b = min(block_b, b_padded8)

    # Megacore: keep >= 2 grid steps whenever there are >= 16 padded rows so
    # both v7x TensorCores get work (harmless on single-TC v5e/v6e).
    if b_padded8 >= 16:
        half = ((b_padded8 // 2 + 7) // 8) * 8
        block_b = min(block_b, half)

    # Pad batch to a multiple of block_b. Padded rows are harmless: the
    # per-row softmax over S of tanh(bias) is finite, and they are sliced off.
    Bp = ((B + block_b - 1) // block_b) * block_b
    x_p = x if Bp == B else jnp.pad(x, ((0, Bp - B), (0, 0), (0, 0)))

    # Guard the block_b == 8 floor: make sure the double-buffered working set
    # is allowed by the scoped-VMEM limit (capped below physical capacity).
    x_block_bytes = block_b * S * F * itemsize
    out_block_bytes = block_b * F * itemsize
    needed = 2 * x_block_bytes + 2 * out_block_bytes + 2 * (S + F) * 4 + 2 * _MiB
    vmem_limit = max(vmem_limit, min(needed, vmem_cap - 8 * _MiB))
    # TODO(synk): for S*F so large that even an 8-row block exceeds VMEM,
    # add a second grid axis over S with a running (flash-style) accumulator.

    w_row = weight.reshape(1, F)     # lane-dense weight
    b_row = bias.reshape(1, S)       # lane-dense bias

    out = pl.pallas_call(
        _attention_kernel,
        out_shape=jax.ShapeDtypeStruct((Bp, F), x.dtype),
        grid_spec=pltpu.PrefetchScalarGridSpec(
            num_scalar_prefetch=0,
            grid=(Bp // block_b,),
            in_specs=[
                pl.BlockSpec((block_b, S, F), lambda i: (i, 0, 0)),  # x block
                pl.BlockSpec((1, F), lambda i: (0, 0)),              # weight
                pl.BlockSpec((1, S), lambda i: (0, 0)),              # bias
            ],
            out_specs=pl.BlockSpec((block_b, F), lambda i: (i, 0)),
        ),
        compiler_params=pltpu.CompilerParams(
            dimension_semantics=("parallel",),
            vmem_limit_bytes=int(vmem_limit),
        ),
    )(x_p, w_row, b_row)

    return out[:B] if Bp != B else out


def attention_reference(x, weight, bias):
    """Pure-JAX reference matching the PyTorch forward exactly."""
    B, S, F = x.shape
    eij = (x.reshape(-1, F) @ weight).reshape(B, S) + bias
    eij = jnp.tanh(eij)
    a = jnp.exp(eij)
    a = a / jnp.sum(a, axis=1, keepdims=True) + 1e-10
    return jnp.sum(x * a[..., None], axis=1)


if __name__ == "__main__":
    # Module hyperparameters (small, consistent with the forward pass).
    batch = 2
    step_dim = 8
    feature_dim = 32

    key = jax.random.PRNGKey(0)
    k_x, k_w = jax.random.split(key)

    # Deterministic parameter init: xavier_uniform_ for weight (F, 1), zero bias.
    bound = math.sqrt(6.0 / (feature_dim + 1))
    weight = jax.random.uniform(k_w, (feature_dim, 1), jnp.float32,
                                minval=-bound, maxval=bound)
    bias = jnp.zeros((step_dim,), jnp.float32)

    x = jax.random.normal(k_x, (batch, step_dim, feature_dim), jnp.float32)

    out = attention_forward(x, weight, bias)
    out = jax.block_until_ready(out)

    ref = attention_reference(x, weight, bias)
    assert out.shape == (batch, feature_dim)
    assert jnp.allclose(out, ref, atol=1e-5, rtol=1e-5), "mismatch vs reference"

    print("KERNEL_OK")
</pallas_src>

<mosaic_0001>
module attributes {stable_mosaic.version = 11 : i64} {
  func.func @_attention_kernel(%arg0: i32, %arg1: memref<8x8x32xf32, #tpu.memory_space<vmem>>, %arg2: memref<1x32xf32, #tpu.memory_space<vmem>>, %arg3: memref<1x8xf32, #tpu.memory_space<vmem>>, %arg4: memref<8x32xf32, #tpu.memory_space<vmem>>) attributes {dimension_semantics = [#tpu.dimension_semantics<parallel>], iteration_bounds = array<i64: 1>, scalar_prefetch = 0 : i64, scratch_operands = 0 : i64, tpu.core_type = #tpu.core_type<tc>, window_params = [{transform_indices = @transform_0, window_bounds = array<i64: 8, 8, 32>}, {pipeline_mode = #tpu.pipeline_mode<synchronous>, transform_indices = @transform_1, window_bounds = array<i64: 1, 32>}, {pipeline_mode = #tpu.pipeline_mode<synchronous>, transform_indices = @transform_2, window_bounds = array<i64: 1, 8>}, {transform_indices = @transform_3, window_bounds = array<i64: 8, 32>}]} {
    %c0 = arith.constant 0 : index
    %c0_0 = arith.constant 0 : index
    %c0_1 = arith.constant 0 : index
    %0 = vector.load %arg1[%c0, %c0_0, %c0_1] : memref<8x8x32xf32, #tpu.memory_space<vmem>>, vector<8x8x32xf32>
    %c0_2 = arith.constant 0 : index
    %c0_3 = arith.constant 0 : index
    %1 = vector.load %arg2[%c0_2, %c0_3] : memref<1x32xf32, #tpu.memory_space<vmem>>, vector<1x32xf32>
    %c0_4 = arith.constant 0 : index
    %c0_5 = arith.constant 0 : index
    %2 = vector.load %arg3[%c0_4, %c0_5] : memref<1x8xf32, #tpu.memory_space<vmem>>, vector<1x8xf32>
    %3 = vector.shape_cast %1 : vector<1x32xf32> to vector<1x1x32xf32>
    %4 = vector.broadcast %3 : vector<1x1x32xf32> to vector<8x8x32xf32>
    %5 = arith.mulf %0, %4 : vector<8x8x32xf32>
    %cst = arith.constant dense<0.000000e+00> : vector<8x8xf32>
    %6 = vector.multi_reduction <add>, %5, %cst [2] : vector<8x8x32xf32> to vector<8x8xf32>
    %7 = vector.broadcast %2 : vector<1x8xf32> to vector<8x8xf32>
    %8 = arith.addf %6, %7 : vector<8x8xf32>
    %9 = math.tanh %8 : vector<8x8xf32>
    %10 = math.exp %9 : vector<8x8xf32>
    %cst_6 = arith.constant dense<0.000000e+00> : vector<8xf32>
    %11 = vector.multi_reduction <add>, %10, %cst_6 [1] : vector<8x8xf32> to vector<8xf32>
    %12 = vector.shape_cast %11 : vector<8xf32> to vector<8x1xf32>
    %13 = tpu.reciprocal %12 : vector<8x1xf32> -> vector<8x1xf32>
    %14 = vector.broadcast %13 : vector<8x1xf32> to vector<8x8xf32>
    %15 = arith.mulf %10, %14 : vector<8x8xf32>
    %cst_7 = arith.constant 1.000000e-10 : f32
    %16 = vector.broadcast %cst_7 : f32 to vector<8x8xf32>
    %17 = arith.addf %15, %16 : vector<8x8xf32>
    %18 = vector.shape_cast %17 : vector<8x8xf32> to vector<8x8x1xf32>
    %19 = vector.broadcast %18 : vector<8x8x1xf32> to vector<8x8x32xf32>
    %20 = arith.mulf %0, %19 : vector<8x8x32xf32>
    %cst_8 = arith.constant dense<0.000000e+00> : vector<8x32xf32>
    %21 = vector.multi_reduction <add>, %20, %cst_8 [1] : vector<8x8x32xf32> to vector<8x32xf32>
    %c0_9 = arith.constant 0 : index
    %c0_10 = arith.constant 0 : index
    %22 = vector.load %arg4[%c0_9, %c0_10] : memref<8x32xf32, #tpu.memory_space<vmem>>, vector<8x32xf32>
    tpu.vector_store %arg4[%c0_9, %c0_10], %21 {strides = array<i32>} : memref<8x32xf32, #tpu.memory_space<vmem>>, vector<8x32xf32>,
    return
  }
  func.func @transform_0(%arg0: i32) -> (i32, i32, i32) {
    %c0_i32 = arith.constant 0 : i32
    %c0_i32_0 = arith.constant 0 : i32
    %c0_i32_1 = arith.constant 0 : i32
    return %arg0, %c0_i32, %c0_i32_0 : i32, i32, i32
  }
  func.func @transform_1(%arg0: i32) -> (i32, i32) {
    %c0_i32 = arith.constant 0 : i32
    %c0_i32_0 = arith.constant 0 : i32
    %c0_i32_1 = arith.constant 0 : i32
    return %c0_i32, %c0_i32_0 : i32, i32
  }
  func.func @transform_2(%arg0: i32) -> (i32, i32) {
    %c0_i32 = arith.constant 0 : i32
    %c0_i32_0 = arith.constant 0 : i32
    %c0_i32_1 = arith.constant 0 : i32
    return %c0_i32, %c0_i32_0 : i32, i32
  }
  func.func @transform_3(%arg0: i32) -> (i32, i32) {
    %c0_i32 = arith.constant 0 : i32
    %c0_i32_0 = arith.constant 0 : i32
    return %arg0, %c0_i32 : i32, i32
  }
}

</mosaic_0001>

<llo_original>
// kernel: tpu_custom_call.1
$region0: #{tpu_custom_call.1}
  #allocation0 [shape = 'u32[]', space=smem, size = 0x4, offset = 0x4, fixed_abs, tag = 'smem constant byte address 0x4 - core index']
  #allocation1 [shape = 'u32[144,128]{1,0:T(1,128)}', space=vmem, size = 0x12000, scoped, tag = 'internal scratch']
  %s0 = inlined_call_operand.hbm [shape: f32[8,8,32], index: 0, kind: input, shape index: {}]
  %s1 = inlined_call_operand.vmem [shape: f32[1,32], index: 1, kind: input, shape index: {}]
  %s2 = inlined_call_operand.vmem [shape: f32[1,8], index: 2, kind: input, shape index: {}]
  %s3 = inlined_call_operand.hbm [shape: f32[8,32], index: 3, kind: output, shape index: {}]
  %s4 = sld [smem:[#allocation0]]
  $region26: #{tpu_custom_call.1} parent=0
    _
  %s6 = ssub.s32 1, %s4
  %s7 = scalar_select 0, %s6, %s4
  $region1: #{tpu_custom_call.1} parent=0
    #allocation2 [shape = 'u8[32768]{0}', space=vmem, size = 0x8000, scoped, tag = 'input window, operand 0, single buffered']
    #allocation3 [shape = 's32[1]{0}', space=sflag, size = 0x4, scoped, tag = 'scoped memory for tpu_custom_call.1']
    #allocation4 [shape = 's32[1]{0}', space=sflag, size = 0x4, scoped, tag = 'scoped memory for tpu_custom_call.1']
    #allocation5 [shape = 'u8[4096]{0}', space=vmem, size = 0x1000, scoped, tag = 'output window, operand 0, single buffered']
    %8 = vsyncpa [#allocation3], 0
    %9 = vsyncpa [#allocation4], 0
    // Predicated region
    $region2: #{tpu_custom_call.1} parent=1 // pred_check
      _
    $region3: #{tpu_custom_call.1} parent=1 // pred_check_branch
      %11 = sbr.rel (0) target = $region5
    $region4: #{tpu_custom_call.1} parent=1 // pred_region
      %s13 = ssub.s32 1024, 1024
      %14 = vsyncadd [#allocation3], %s13
      %s15 = sshll.u32 [#allocation2], 4
      %s16 = int_to_ptr.vmem [resolvable:$true] %s15
      %21 = dma.hbm_to_vmem [thread:$0]  %s0, 1024, %s16, [#allocation3], 128, 128, 8
    $region5: #{tpu_custom_call.1} parent=1 // pred_fallthru
      _
    // Predicated region
    $region6: #{tpu_custom_call.1} parent=1 // pred_check
      _
    $region7: #{tpu_custom_call.1} parent=1 // pred_check_branch
      %23 = sbr.rel (0) target = $region9
    $region8: #{tpu_custom_call.1} parent=1 // pred_region
      _
    $region9: #{tpu_custom_call.1} parent=1 // pred_fallthru
      _
    // Predicated region
    $region10: #{tpu_custom_call.1} parent=1 // pred_check
      _
    $region11: #{tpu_custom_call.1} parent=1 // pred_check_branch
      %25 = sbr.rel (0) target = $region13
    $region12: #{tpu_custom_call.1} parent=1 // pred_region
      _
    $region13: #{tpu_custom_call.1} parent=1 // pred_fallthru
      _
    // Predicated region
    $region14: #{tpu_custom_call.1} parent=1 // pred_check
      _
    $region15: #{tpu_custom_call.1} parent=1 // pred_check_branch
      %27 = sbr.rel (0) target = $region17
    $region16: #{tpu_custom_call.1} parent=1 // pred_region
      %28 = dma.done [#allocation3], 1024
    $region17: #{tpu_custom_call.1} parent=1 // pred_fallthru
      _
    %v29 = vld [vmem:[#allocation2] sm:$0xff]
    %v30 = vld [vmem:[#allocation2 + $0x8] sm:$0xff]
    %v31 = vld [vmem:[#allocation2 + $0x10] sm:$0xff]
    %v32 = vld [vmem:[#allocation2 + $0x18] sm:$0xff]
    %v33 = vld [vmem:[#allocation2 + $0x20] sm:$0xff]
    %v34 = vld [vmem:[#allocation2 + $0x28] sm:$0xff]
    %v35 = vld [vmem:[#allocation2 + $0x30] sm:$0xff]
    %v36 = vld [vmem:[#allocation2 + $0x38] sm:$0xff]
    %v37 = vld [vmem:[%s1] sm:$0x1]
    %v38 = vld [vmem:[%s2] sm:$0x1]
    %v40 = vlaneseq
    %v41 = vshrl.u32 %v40, 7
    %v42 = vsub.s32 0, %v41
    %v43 = vrot.slane %v37, %v42
    %v45 = vmul.f32 %v29, %v43
    %v46 = vmul.f32 %v30, %v43
    %v47 = vmul.f32 %v31, %v43
    %v48 = vmul.f32 %v32, %v43
    %v49 = vmul.f32 %v33, %v43
    %v50 = vmul.f32 %v34, %v43
    %v51 = vmul.f32 %v35, %v43
    %v52 = vmul.f32 %v36, %v43
    %vm53 = vcmask 261120
    %v54 = vsel %vm53, %v45, 0.0
    %55 = vadd.xlane.f32.xlu0 %v54
    %v56 = vpop.xlane.xlu0 %55
    %v57 = vsel %vm53, %v46, 0.0
    %58 = vadd.xlane.f32.xlu0 %v57
    %v59 = vpop.xlane.xlu0 %58
    %v60 = vsel %vm53, %v47, 0.0
    %61 = vadd.xlane.f32.xlu0 %v60
    %v62 = vpop.xlane.xlu0 %61
    %v63 = vsel %vm53, %v48, 0.0
    %64 = vadd.xlane.f32.xlu0 %v63
    %v65 = vpop.xlane.xlu0 %64
    %v66 = vsel %vm53, %v49, 0.0
    %67 = vadd.xlane.f32.xlu0 %v66
    %v68 = vpop.xlane.xlu0 %67
    %v69 = vsel %vm53, %v50, 0.0
    %70 = vadd.xlane.f32.xlu0 %v69
    %v71 = vpop.xlane.xlu0 %70
    %v72 = vsel %vm53, %v51, 0.0
    %73 = vadd.xlane.f32.xlu0 %v72
    %v74 = vpop.xlane.xlu0 %73
    %v75 = vsel %vm53, %v52, 0.0
    %76 = vadd.xlane.f32.xlu0 %v75
    %v77 = vpop.xlane.xlu0 %76
    %v79 = vlaneseq
    %v80 = vshrl.u32 %v79, 7
    %v81 = vsub.s32 0, %v80
    %v82 = vrot.slane %v38, %v81
    %84 = vbcast.lane.b32.xlu0 %v82, 256
    %v85 = vpop.permute.xlu0 %84
    %v87 = vadd.f32 %v56, %v85
    %v88 = vadd.f32 %v59, %v85
    %v89 = vadd.f32 %v62, %v85
    %v90 = vadd.f32 %v65, %v85
    %v91 = vadd.f32 %v68, %v85
    %v92 = vadd.f32 %v71, %v85
    %v93 = vadd.f32 %v74, %v85
    %v94 = vadd.f32 %v77, %v85
    %v95 = vtanh.pop %v87
    %v96 = vtanh.pop %v88
    %v97 = vtanh.pop %v89
    %v98 = vtanh.pop %v90
    %v99 = vtanh.pop %v91
    %v100 = vtanh.pop %v92
    %v101 = vtanh.pop %v93
    %v102 = vtanh.pop %v94
    %v103 = vmul.f32 %v95, 1.442695
    %v104 = vpow.pop %v103
    %v105 = vmul.f32 %v96, 1.442695
    %v106 = vpow.pop %v105
    %v107 = vmul.f32 %v97, 1.442695
    %v108 = vpow.pop %v107
    %v109 = vmul.f32 %v98, 1.442695
    %v110 = vpow.pop %v109
    %v111 = vmul.f32 %v99, 1.442695
    %v112 = vpow.pop %v111
    %v113 = vmul.f32 %v100, 1.442695
    %v114 = vpow.pop %v113
    %v115 = vmul.f32 %v101, 1.442695
    %v116 = vpow.pop %v115
    %v117 = vmul.f32 %v102, 1.442695
    %v118 = vpow.pop %v117
    %127 = vset.pattern.permute.xlu0 0
    %128 = vperm.xlu0 %127, %v104
    %v129 = vpop.permute.xlu0 %128
    %130 = vset.pattern.permute.xlu0 0
    %131 = vperm.xlu0 %130, %v106
    %v132 = vpop.permute.xlu0 %131
    %133 = vset.pattern.permute.xlu0 0
    %134 = vperm.xlu0 %133, %v108
    %v135 = vpop.permute.xlu0 %134
    %136 = vset.pattern.permute.xlu0 0
    %137 = vperm.xlu0 %136, %v110
    %v138 = vpop.permute.xlu0 %137
    %139 = vset.pattern.permute.xlu0 0
    %140 = vperm.xlu0 %139, %v112
    %v141 = vpop.permute.xlu0 %140
    %142 = vset.pattern.permute.xlu0 0
    %143 = vperm.xlu0 %142, %v114
    %v144 = vpop.permute.xlu0 %143
    %145 = vset.pattern.permute.xlu0 0
    %146 = vperm.xlu0 %145, %v116
    %v147 = vpop.permute.xlu0 %146
    %148 = vset.pattern.permute.xlu0 0
    %149 = vperm.xlu0 %148, %v118
    %v150 = vpop.permute.xlu0 %149
    %v151 = vlaneseq
    %v152 = vand.u32 %v151, 127
    %v153 = vlaneseq
    %v154 = vshrl.u32 %v153, 7
    %v155 = vsub.s32 %v152, %v154
    %v156 = vrot.slane %v129, %v155
    %v157 = vlaneseq
    %v158 = vshrl.u32 %v157, 7
    %v159 = vsub.s32 %v152, %v158
    %v160 = vrot.slane %v132, %v159
    %v161 = vlaneseq
    %v162 = vshrl.u32 %v161, 7
    %v163 = vsub.s32 %v152, %v162
    %v164 = vrot.slane %v135, %v163
    %v165 = vlaneseq
    %v166 = vshrl.u32 %v165, 7
    %v167 = vsub.s32 %v152, %v166
    %v168 = vrot.slane %v138, %v167
    %v169 = vlaneseq
    %v170 = vshrl.u32 %v169, 7
    %v171 = vsub.s32 %v152, %v170
    %v172 = vrot.slane %v141, %v171
    %v173 = vlaneseq
    %v174 = vshrl.u32 %v173, 7
    %v175 = vsub.s32 %v152, %v174
    %v176 = vrot.slane %v144, %v175
    %v177 = vlaneseq
    %v178 = vshrl.u32 %v177, 7
    %v179 = vsub.s32 %v152, %v178
    %v180 = vrot.slane %v147, %v179
    %v181 = vlaneseq
    %v182 = vshrl.u32 %v181, 7
    %v183 = vsub.s32 %v152, %v182
    %v184 = vrot.slane %v150, %v183
    %vm185 = vcmask 1041409
    %v186 = vsel %vm185, %v160, %v156
    %vm187 = vcmask 1042434
    %v188 = vsel %vm187, %v164, %v186
    %vm189 = vcmask 1043459
    %v190 = vsel %vm189, %v168, %v188
    %vm191 = vcmask 1044484
    %v192 = vsel %vm191, %v172, %v190
    %vm193 = vcmask 1045509
    %v194 = vsel %vm193, %v176, %v192
    %vm195 = vcmask 1046534
    %v196 = vsel %vm195, %v180, %v194
    %vm197 = vcmask 1047559
    %v198 = vsel %vm197, %v184, %v196
    %vm200 = vcmask 64512
    %v201 = vsel %vm200, %v198, 0.0
    %202 = vadd.xlane.f32.xlu0 %v201
    %v203 = vpop.xlane.xlu0 %202
    %v204 = vrcp.pop %v203
    %v206 = vlaneseq
    %v207 = vshrl.u32 %v206, 7
    %v208 = vsub.s32 0, %v207
    %v209 = vrot.slane %v204, %v208
    %v210 = vlaneseq
    %v211 = vshrl.u32 %v210, 7
    %v212 = vsub.s32 1, %v211
    %v213 = vrot.slane %v204, %v212
    %v214 = vlaneseq
    %v215 = vshrl.u32 %v214, 7
    %v216 = vsub.s32 2, %v215
    %v217 = vrot.slane %v204, %v216
    %v218 = vlaneseq
    %v219 = vshrl.u32 %v218, 7
    %v220 = vsub.s32 3, %v219
    %v221 = vrot.slane %v204, %v220
    %v222 = vlaneseq
    %v223 = vshrl.u32 %v222, 7
    %v224 = vsub.s32 4, %v223
    %v225 = vrot.slane %v204, %v224
    %v226 = vlaneseq
    %v227 = vshrl.u32 %v226, 7
    %v228 = vsub.s32 5, %v227
    %v229 = vrot.slane %v204, %v228
    %v230 = vlaneseq
    %v231 = vshrl.u32 %v230, 7
    %v232 = vsub.s32 6, %v231
    %v233 = vrot.slane %v204, %v232
    %v234 = vlaneseq
    %v235 = vshrl.u32 %v234, 7
    %v236 = vsub.s32 7, %v235
    %v237 = vrot.slane %v204, %v236
    %v246 = vmul.f32 %v104, %v209
    %v247 = vmul.f32 %v106, %v213
    %v248 = vmul.f32 %v108, %v217
    %v249 = vmul.f32 %v110, %v221
    %v250 = vmul.f32 %v112, %v225
    %v251 = vmul.f32 %v114, %v229
    %v252 = vmul.f32 %v116, %v233
    %v253 = vmul.f32 %v118, %v237
    %v254 = vadd.f32 %v246, 1e-10
    %v255 = vadd.f32 %v247, 1e-10
    %v256 = vadd.f32 %v248, 1e-10
    %v257 = vadd.f32 %v249, 1e-10
    %v258 = vadd.f32 %v250, 1e-10
    %v259 = vadd.f32 %v251, 1e-10
    %v260 = vadd.f32 %v252, 1e-10
    %v261 = vadd.f32 %v253, 1e-10
    %263 = vset.pattern.permute.xlu0 0
    %264 = vperm.xlu0 %263, %v254
    %v265 = vpop.permute.xlu0 %264
    %268 = vset.pattern.permute.xlu0 0
    %269 = vperm.xlu0 %268, %v255
    %v270 = vpop.permute.xlu0 %269
    %273 = vset.pattern.permute.xlu0 0
    %274 = vperm.xlu0 %273, %v256
    %v275 = vpop.permute.xlu0 %274
    %278 = vset.pattern.permute.xlu0 0
    %279 = vperm.xlu0 %278, %v257
    %v280 = vpop.permute.xlu0 %279
    %283 = vset.pattern.permute.xlu0 0
    %284 = vperm.xlu0 %283, %v258
    %v285 = vpop.permute.xlu0 %284
    %288 = vset.pattern.permute.xlu0 0
    %289 = vperm.xlu0 %288, %v259
    %v290 = vpop.permute.xlu0 %289
    %293 = vset.pattern.permute.xlu0 0
    %294 = vperm.xlu0 %293, %v260
    %v295 = vpop.permute.xlu0 %294
    %298 = vset.pattern.permute.xlu0 0
    %299 = vperm.xlu0 %298, %v261
    %v300 = vpop.permute.xlu0 %299
    %v302 = vmul.f32 %v29, %v265
    %v303 = vmul.f32 %v30, %v270
    %v304 = vmul.f32 %v31, %v275
    %v305 = vmul.f32 %v32, %v280
    %v306 = vmul.f32 %v33, %v285
    %v307 = vmul.f32 %v34, %v290
    %v308 = vmul.f32 %v35, %v295
    %v309 = vmul.f32 %v36, %v300
    %v310 = vsel %vm53, %v302, 0.0
    %v311 = vrot.slane %v310, 4
    %v312 = vadd.f32 %v310, %v311
    %v313 = vrot.slane %v312, 2
    %v314 = vadd.f32 %v312, %v313
    %v315 = vrot.slane %v314, 1
    %v316 = vadd.f32 %v314, %v315
    %v317 = vsel %vm53, %v303, 0.0
    %v318 = vrot.slane %v317, 4
    %v319 = vadd.f32 %v317, %v318
    %v320 = vrot.slane %v319, 2
    %v321 = vadd.f32 %v319, %v320
    %v322 = vrot.slane %v321, 1
    %v323 = vadd.f32 %v321, %v322
    %v324 = vsel %vm53, %v304, 0.0
    %v325 = vrot.slane %v324, 4
    %v326 = vadd.f32 %v324, %v325
    %v327 = vrot.slane %v326, 2
    %v328 = vadd.f32 %v326, %v327
    %v329 = vrot.slane %v328, 1
    %v330 = vadd.f32 %v328, %v329
    %v331 = vsel %vm53, %v305, 0.0
    %v332 = vrot.slane %v331, 4
    %v333 = vadd.f32 %v331, %v332
    %v334 = vrot.slane %v333, 2
    %v335 = vadd.f32 %v333, %v334
    %v336 = vrot.slane %v335, 1
    %v337 = vadd.f32 %v335, %v336
    %v338 = vsel %vm53, %v306, 0.0
    %v339 = vrot.slane %v338, 4
    %v340 = vadd.f32 %v338, %v339
    %v341 = vrot.slane %v340, 2
    %v342 = vadd.f32 %v340, %v341
    %v343 = vrot.slane %v342, 1
    %v344 = vadd.f32 %v342, %v343
    %v345 = vsel %vm53, %v307, 0.0
    %v346 = vrot.slane %v345, 4
    %v347 = vadd.f32 %v345, %v346
    %v348 = vrot.slane %v347, 2
    %v349 = vadd.f32 %v347, %v348
    %v350 = vrot.slane %v349, 1
    %v351 = vadd.f32 %v349, %v350
    %v352 = vsel %vm53, %v308, 0.0
    %v353 = vrot.slane %v352, 4
    %v354 = vadd.f32 %v352, %v353
    %v355 = vrot.slane %v354, 2
    %v356 = vadd.f32 %v354, %v355
    %v357 = vrot.slane %v356, 1
    %v358 = vadd.f32 %v356, %v357
    %v359 = vsel %vm53, %v309, 0.0
    %v360 = vrot.slane %v359, 4
    %v361 = vadd.f32 %v359, %v360
    %v362 = vrot.slane %v361, 2
    %v363 = vadd.f32 %v361, %v362
    %v364 = vrot.slane %v363, 1
    %v365 = vadd.f32 %v363, %v364
    %v374 = vsel %vm185, %v323, %v316
    %v375 = vsel %vm187, %v330, %v374
    %v376 = vsel %vm189, %v337, %v375
    %v377 = vsel %vm191, %v344, %v376
    %v378 = vsel %vm193, %v351, %v377
    %v379 = vsel %vm195, %v358, %v378
    %v380 = vsel %vm197, %v365, %v379
    %382 = vst.msk [vmem:[#allocation5] sm:$0xff] %vm53, %v380
    // Predicated region
    $region18: #{tpu_custom_call.1} parent=1 // pred_check
      _
    $region19: #{tpu_custom_call.1} parent=1 // pred_check_branch
      %384 = sbr.rel (0) target = $region21
    $region20: #{tpu_custom_call.1} parent=1 // pred_region
      %s386 = ssub.s32 128, 128
      %387 = vsyncadd [#allocation4], %s386
      %s389 = sshll.u32 [#allocation5], 4
      %s390 = int_to_ptr.vmem [resolvable:$true] %s389
      %392 = dma.vmem_to_hbm [thread:$0]  %s390, 128, %s3, [#allocation4]
    $region21: #{tpu_custom_call.1} parent=1 // pred_fallthru
      _
    // Predicated region
    $region22: #{tpu_custom_call.1} parent=1 // pred_check
      _
    $region23: #{tpu_custom_call.1} parent=1 // pred_check_branch
      %394 = sbr.rel (0) target = $region25
    $region24: #{tpu_custom_call.1} parent=1 // pred_region
      %395 = dma.done [#allocation4], 128
    $region25: #{tpu_custom_call.1} parent=1 // pred_fallthru
      _
    %396 = vsyncpa [#allocation3], 1
    %397 = vsyncpa [#allocation4], 1

</llo_original>
